<compile_context>
chip_gen: v7x
topology: tpu7x:2x2x1
jax: 0.10.0
libtpu: 0.0.40
codegen_flags: <defaults>
</compile_context>

<pallas_src>
import functools
import math

import jax
import jax.numpy as jnp
from jax.experimental import pallas as pl
from jax.experimental.pallas import tpu as pltpu


# ----------------------------------------------------------------------------
# Row-tiling helpers
# ----------------------------------------------------------------------------
def _sublane_pack(dtype) -> int:
    """Rows per packed sublane group: 8 for f32, 16 for bf16, 32 for int8/fp8."""
    return 8 * max(1, 4 // jnp.dtype(dtype).itemsize)


def _pad_rows(x2d: jax.Array, sublane: int) -> jax.Array:
    pad = (-x2d.shape[0]) % sublane
    if pad:
        x2d = jnp.pad(x2d, ((0, pad), (0, 0)))
    return x2d


def _pick_row_tile(rows: int, row_bytes: int, sublane: int,
                   target_bytes: int = 2 << 20, min_steps: int = 8) -> int:
    """Largest row tile (multiple of `sublane`, divisor of `rows`) keeping one
    block near `target_bytes` while preserving >= `min_steps` grid steps."""
    cap = max(sublane, (target_bytes // max(row_bytes, 1)) // sublane * sublane)
    steps_cap = max(sublane, (rows // min_steps) // sublane * sublane)
    tile = max(sublane, min(cap, steps_cap, rows) // sublane * sublane)
    while tile > sublane and rows % tile:
        tile -= sublane
    return tile


# ----------------------------------------------------------------------------
# Kernels
# ----------------------------------------------------------------------------
def _fused_down_q_kernel(x_ref, w_ref, g_ref, o_ref, *, eps):
    # y = x @ W (f32 accumulate), then RMSNorm over the output features.
    y = jnp.dot(x_ref[...], w_ref[...], preferred_element_type=jnp.float32)
    ms = jnp.mean(y * y, axis=-1, keepdims=True)
    normed = (y * jax.lax.rsqrt(ms + eps)).astype(o_ref.dtype)
    o_ref[...] = normed * g_ref[...]          # gamma pre-cast outside the kernel


def _fused_down_kv_kernel(x_ref, wc_ref, wr_ref, g_ref, ckv_ref, kr_ref, *, eps):
    x = x_ref[...]
    c = jnp.dot(x, wc_ref[...], preferred_element_type=jnp.float32)
    r = jnp.dot(x, wr_ref[...], preferred_element_type=jnp.float32)
    ms = jnp.mean(c * c, axis=-1, keepdims=True)
    ckv_ref[...] = (c * jax.lax.rsqrt(ms + eps)).astype(ckv_ref.dtype) * g_ref[...]
    kr_ref[...] = r.astype(kr_ref.dtype)


def _linear_kernel(x_ref, w_ref, o_ref):
    o_ref[...] = jnp.dot(x_ref[...], w_ref[...],
                         preferred_element_type=jnp.float32).astype(o_ref.dtype)


def _attention_kernel(q_ref, k_ref, v_ref, o_ref, *, scale):
    q = q_ref[0, 0].astype(jnp.float32)                      # [S, Dq]
    k = k_ref[0, 0].astype(jnp.float32)                      # [S, Dq]
    v = v_ref[0, 0].astype(jnp.float32)                      # [S, Dv]
    s = jax.lax.dot_general(q, k, (((1,), (1,)), ((), ())),
                            preferred_element_type=jnp.float32) * scale
    s = s - jnp.max(s, axis=-1, keepdims=True)
    p = jnp.exp(s)
    p = p / jnp.sum(p, axis=-1, keepdims=True)
    o_ref[0, 0] = jnp.dot(p, v, preferred_element_type=jnp.float32
                          ).astype(o_ref.dtype)


def _attention_mask_kernel(q_ref, k_ref, v_ref, m_ref, o_ref, *, scale):
    q = q_ref[0, 0].astype(jnp.float32)
    k = k_ref[0, 0].astype(jnp.float32)
    v = v_ref[0, 0].astype(jnp.float32)
    s = jax.lax.dot_general(q, k, (((1,), (1,)), ((), ())),
                            preferred_element_type=jnp.float32) * scale
    s = jnp.where(m_ref[0] != 0, s, -jnp.inf)                # masked_fill(mask==0, -inf)
    s = s - jnp.max(s, axis=-1, keepdims=True)
    p = jnp.exp(s)
    p = p / jnp.sum(p, axis=-1, keepdims=True)
    o_ref[0, 0] = jnp.dot(p, v, preferred_element_type=jnp.float32
                          ).astype(o_ref.dtype)


# ----------------------------------------------------------------------------
# Pallas wrappers
# ----------------------------------------------------------------------------
def fused_linear_rmsnorm(x2d, w_io, gamma, *, eps=1e-6):
    """rmsnorm(x2d @ w_io) * gamma, fused. w_io is [in_features, out_features]."""
    rows0, K = x2d.shape
    N = w_io.shape[1]
    out_dtype = jnp.result_type(x2d.dtype, w_io.dtype)
    sublane = _sublane_pack(x2d.dtype)
    xp = _pad_rows(x2d, sublane)
    rows = xp.shape[0]
    tile = _pick_row_tile(rows, 4 * (K + 2 * N), sublane)
    out = pl.pallas_call(
        functools.partial(_fused_down_q_kernel, eps=eps),
        out_shape=jax.ShapeDtypeStruct((rows, N), out_dtype),
        grid_spec=pltpu.PrefetchScalarGridSpec(
            num_scalar_prefetch=0,
            grid=(rows // tile,),
            in_specs=[
                pl.BlockSpec((tile, K), lambda i: (i, 0)),
                pl.BlockSpec((K, N), lambda i: (0, 0)),      # weight stays VMEM-resident
                pl.BlockSpec((1, N), lambda i: (0, 0)),
            ],
            out_specs=pl.BlockSpec((tile, N), lambda i: (i, 0)),
        ),
        compiler_params=pltpu.CompilerParams(
            dimension_semantics=("parallel",)),
    )(xp, w_io, gamma.astype(out_dtype).reshape(1, N))
    return out if rows == rows0 else out[:rows0]


def fused_kv_down(x2d, w_io, gamma, kv_rank, *, eps=1e-6):
    """kv_down_proj + split + RMSNorm(c_kv), fused into one pass over x."""
    rows0, K = x2d.shape
    N = w_io.shape[1]
    rope = N - kv_rank
    out_dtype = jnp.result_type(x2d.dtype, w_io.dtype)
    sublane = _sublane_pack(x2d.dtype)
    xp = _pad_rows(x2d, sublane)
    rows = xp.shape[0]
    tile = _pick_row_tile(rows, 4 * (K + 2 * N), sublane)
    wc, wr = w_io[:, :kv_rank], w_io[:, kv_rank:]
    c_kv, k_rope = pl.pallas_call(
        functools.partial(_fused_down_kv_kernel, eps=eps),
        out_shape=(jax.ShapeDtypeStruct((rows, kv_rank), out_dtype),
                   jax.ShapeDtypeStruct((rows, rope), out_dtype)),
        grid_spec=pltpu.PrefetchScalarGridSpec(
            num_scalar_prefetch=0,
            grid=(rows // tile,),
            in_specs=[
                pl.BlockSpec((tile, K), lambda i: (i, 0)),
                pl.BlockSpec((K, kv_rank), lambda i: (0, 0)),
                pl.BlockSpec((K, rope), lambda i: (0, 0)),
                pl.BlockSpec((1, kv_rank), lambda i: (0, 0)),
            ],
            out_specs=[pl.BlockSpec((tile, kv_rank), lambda i: (i, 0)),
                       pl.BlockSpec((tile, rope), lambda i: (i, 0))],
        ),
        compiler_params=pltpu.CompilerParams(
            dimension_semantics=("parallel",)),
    )(xp, wc, wr, gamma.astype(out_dtype).reshape(1, kv_rank))
    if rows != rows0:
        c_kv, k_rope = c_kv[:rows0], k_rope[:rows0]
    return c_kv, k_rope


def linear(x2d, w_io):
    """x2d @ w_io with row-tiled grid; w_io is [in_features, out_features]."""
    # TODO(synk): for production-size projections also tile K/N instead of
    # keeping the whole weight as a single resident VMEM block.
    rows0, K = x2d.shape
    N = w_io.shape[1]
    out_dtype = jnp.result_type(x2d.dtype, w_io.dtype)
    sublane = _sublane_pack(x2d.dtype)
    xp = _pad_rows(x2d, sublane)
    rows = xp.shape[0]
    tile = _pick_row_tile(rows, 4 * (K + N), sublane)
    out = pl.pallas_call(
        _linear_kernel,
        out_shape=jax.ShapeDtypeStruct((rows, N), out_dtype),
        grid_spec=pltpu.PrefetchScalarGridSpec(
            num_scalar_prefetch=0,
            grid=(rows // tile,),
            in_specs=[pl.BlockSpec((tile, K), lambda i: (i, 0)),
                      pl.BlockSpec((K, N), lambda i: (0, 0))],
            out_specs=pl.BlockSpec((tile, N), lambda i: (i, 0)),
        ),
        compiler_params=pltpu.CompilerParams(
            dimension_semantics=("parallel",)),
    )(xp, w_io)
    return out if rows == rows0 else out[:rows0]


def mla_attention(q, k, v, mask=None, *, scale):
    """softmax(q k^T * scale) @ v, one (batch, head) block per grid step."""
    # TODO(synk): full-seq block per head; switch to flash-style KV tiling for
    # long sequences.
    B, H, S, Dq = q.shape
    Dv = v.shape[-1]
    qk_spec = pl.BlockSpec((1, 1, S, Dq), lambda b, h: (b, h, 0, 0))
    v_spec = pl.BlockSpec((1, 1, S, Dv), lambda b, h: (b, h, 0, 0))
    o_spec = pl.BlockSpec((1, 1, S, Dv), lambda b, h: (b, h, 0, 0))
    in_specs = [qk_spec, qk_spec, v_spec]
    inputs = [q, k, v]
    if mask is None:
        kernel = functools.partial(_attention_kernel, scale=scale)
    else:
        in_specs.append(pl.BlockSpec((1, S, S), lambda b, h: (b, 0, 0)))
        inputs.append(mask)
        kernel = functools.partial(_attention_mask_kernel, scale=scale)
    return pl.pallas_call(
        kernel,
        out_shape=jax.ShapeDtypeStruct((B, H, S, Dv), q.dtype),
        grid_spec=pltpu.PrefetchScalarGridSpec(
            num_scalar_prefetch=0,
            grid=(B, H),
            in_specs=in_specs,
            out_specs=o_spec,
        ),
        compiler_params=pltpu.CompilerParams(
            dimension_semantics=("parallel", "parallel")),
    )(*inputs)


# ----------------------------------------------------------------------------
# RoPE plumbing (elementwise, stays in JAX)
# ----------------------------------------------------------------------------
def _rope_cos_sin(seq_len, dim, base, dtype):
    inv_freq = 1.0 / (base ** (jnp.arange(0, dim, 2, dtype=jnp.float32) / dim))
    t = jnp.arange(seq_len, dtype=jnp.float32)
    freqs = jnp.outer(t, inv_freq)
    emb = jnp.concatenate([freqs, freqs], axis=-1)
    return jnp.cos(emb).astype(dtype), jnp.sin(emb).astype(dtype)


def _rotate_half(x):
    h = x.shape[-1] // 2
    return jnp.concatenate([-x[..., h:], x[..., :h]], axis=-1)


def _apply_rope(q, k, cos, sin, position):
    cos = cos[position][:, None]          # [B, 1, S, D]
    sin = sin[position][:, None]
    return q * cos + _rotate_half(q) * sin, k * cos + _rotate_half(k) * sin


# ----------------------------------------------------------------------------
# Full MLA forward (Pallas kernels + layout plumbing)
# ----------------------------------------------------------------------------
def mla_forward(params, cfg, x, position, mask=None):
    B, S, hidden = x.shape
    H = cfg["head_nums"]
    nope, rope = cfg["qk_nope_head_dim"], cfg["qk_rope_head_dim"]
    q_hd, v_hd = cfg["q_head_dim"], cfg["v_head_dim"]

    x2d = x.reshape(B * S, hidden)

    # q path: down-proj + RMSNorm fused, then up-proj.
    q_lat = fused_linear_rmsnorm(x2d, params["q_down_w"], params["q_down_norm_w"])
    q = linear(q_lat, params["q_up_w"])
    q = q.reshape(B, S, H, q_hd).transpose(0, 2, 1, 3)        # [B, H, S, q_hd]
    q_nope, q_rope = q[..., :nope], q[..., nope:]

    # kv path: down-proj + split + RMSNorm(c_kv) fused, then up-proj.
    c_kv, k_rope = fused_kv_down(x2d, params["kv_down_w"],
                                 params["kv_down_norm_w"], cfg["kv_lora_rank"])
    kv = linear(c_kv, params["kv_up_w"])
    kv = kv.reshape(B, S, H, nope + v_hd).transpose(0, 2, 1, 3)
    k_nope, v_state = kv[..., :nope], kv[..., nope:]

    # RoPE.
    k_rope = k_rope.reshape(B, S, rope)[:, None]              # [B, 1, S, rope]
    cos, sin = _rope_cos_sin(S, rope, cfg["rope_theta"], x.dtype)
    q_rope, k_rope = _apply_rope(q_rope, k_rope, cos, sin, position)
    k_rope = jnp.broadcast_to(k_rope, (B, H, S, rope))

    q_state = jnp.concatenate([q_nope, q_rope], axis=-1)
    k_state = jnp.concatenate([k_nope, k_rope], axis=-1)

    # TODO(synk): attention dropout (nn.Dropout) not implemented; behaves as
    # eval mode / dropout_rate == 0.
    att = mla_attention(q_state, k_state, v_state, mask,
                        scale=1.0 / math.sqrt(v_hd))
    att = att.transpose(0, 2, 1, 3).reshape(B * S, H * v_hd)
    return linear(att, params["out_w"]).reshape(B, S, hidden)


# ----------------------------------------------------------------------------
# Pure-JAX reference (mirrors the PyTorch forward op-by-op)
# ----------------------------------------------------------------------------
def _rmsnorm_ref(x, w, eps=1e-6):
    xf = x.astype(jnp.float32)
    inv = jax.lax.rsqrt(jnp.mean(xf * xf, axis=-1, keepdims=True) + eps)
    return (xf * inv).astype(x.dtype) * w


def mla_forward_ref(params, cfg, x, position, mask=None):
    B, S, hidden = x.shape
    H = cfg["head_nums"]
    nope, rope = cfg["qk_nope_head_dim"], cfg["qk_rope_head_dim"]
    q_hd, v_hd = cfg["q_head_dim"], cfg["v_head_dim"]

    x2d = x.reshape(B * S, hidden)
    q = _rmsnorm_ref(x2d @ params["q_down_w"], params["q_down_norm_w"])
    q = (q @ params["q_up_w"]).reshape(B, S, H, q_hd).transpose(0, 2, 1, 3)
    q_nope, q_rope = q[..., :nope], q[..., nope:]

    ckv_full = x2d @ params["kv_down_w"]
    c_kv, k_rope = ckv_full[:, :cfg["kv_lora_rank"]], ckv_full[:, cfg["kv_lora_rank"]:]
    c_kv = _rmsnorm_ref(c_kv, params["kv_down_norm_w"])
    kv = (c_kv @ params["kv_up_w"]).reshape(B, S, H, nope + v_hd).transpose(0, 2, 1, 3)
    k_nope, v_state = kv[..., :nope], kv[..., nope:]

    k_rope = k_rope.reshape(B, S, rope)[:, None]
    cos, sin = _rope_cos_sin(S, rope, cfg["rope_theta"], x.dtype)
    q_rope, k_rope = _apply_rope(q_rope, k_rope, cos, sin, position)
    k_rope = jnp.broadcast_to(k_rope, (B, H, S, rope))

    q_state = jnp.concatenate([q_nope, q_rope], axis=-1)
    k_state = jnp.concatenate([k_nope, k_rope], axis=-1)

    att_w = jnp.einsum("bhqd,bhkd->bhqk", q_state, k_state) / math.sqrt(v_hd)
    if mask is not None:
        att_w = jnp.where(mask[:, None] != 0, att_w, -jnp.inf)
    att_w = jax.nn.softmax(att_w, axis=-1)
    att = jnp.einsum("bhqk,bhkd->bhqd", att_w, v_state)
    att = att.transpose(0, 2, 1, 3).reshape(B * S, H * v_hd)
    return (att @ params["out_w"]).reshape(B, S, hidden)


if __name__ == "__main__":
    cfg = dict(
        hidden_dim=32, head_nums=2, max_seq_len=8, rope_theta=10000.0,
        dropout_rate=0.0, q_lora_rank=16, qk_rope_head_dim=8,
        kv_lora_rank=16, v_head_dim=16, qk_nope_head_dim=16, q_head_dim=24,
    )
    B, S = 2, 8
    H = cfg["head_nums"]

    key = jax.random.PRNGKey(0)
    ks = jax.random.split(key, 6)

    def w_init(k, shape, scale=0.05):
        return scale * jax.random.normal(k, shape, dtype=jnp.float32)

    params = {
        # Linear weights stored as [in_features, out_features] (torch W.T).
        "q_down_w": w_init(ks[0], (cfg["hidden_dim"], cfg["q_lora_rank"])),
        "q_down_norm_w": jnp.ones((cfg["q_lora_rank"],), jnp.float32),
        "q_up_w": w_init(ks[1], (cfg["q_lora_rank"], H * cfg["q_head_dim"])),
        "kv_down_w": w_init(ks[2], (cfg["hidden_dim"],
                                    cfg["kv_lora_rank"] + cfg["qk_rope_head_dim"])),
        "kv_down_norm_w": jnp.ones((cfg["kv_lora_rank"],), jnp.float32),
        "kv_up_w": w_init(ks[3], (cfg["kv_lora_rank"],
                                  H * (cfg["qk_nope_head_dim"] + cfg["v_head_dim"]))),
        "out_w": w_init(ks[4], (H * cfg["v_head_dim"], cfg["hidden_dim"])),
    }

    x = jax.random.normal(ks[5], (B, S, cfg["hidden_dim"]), dtype=jnp.float32)
    position = jnp.broadcast_to(jnp.arange(S, dtype=jnp.int32), (B, S))

    out = mla_forward(params, cfg, x, position, mask=None)
    out = jax.block_until_ready(out)

    ref = mla_forward_ref(params, cfg, x, position, mask=None)
    assert out.shape == (B, S, cfg["hidden_dim"]), out.shape
    max_err = jnp.max(jnp.abs(out - ref))
    assert bool(jnp.allclose(out, ref, atol=1e-3, rtol=1e-3)), \
        f"mismatch vs reference: max abs err {max_err}"

    print("KERNEL_OK")
</pallas_src>

<mosaic_0001>
module attributes {stable_mosaic.version = 11 : i64} {
  func.func @_fused_down_q_kernel(%arg0: i32, %arg1: memref<8x32xf32, #tpu.memory_space<vmem>>, %arg2: memref<32x16xf32, #tpu.memory_space<vmem>>, %arg3: memref<1x16xf32, #tpu.memory_space<vmem>>, %arg4: memref<8x16xf32, #tpu.memory_space<vmem>>) attributes {dimension_semantics = [#tpu.dimension_semantics<parallel>], iteration_bounds = array<i64: 2>, scalar_prefetch = 0 : i64, scratch_operands = 0 : i64, tpu.core_type = #tpu.core_type<tc>, window_params = [{transform_indices = @transform_0, window_bounds = array<i64: 8, 32>}, {pipeline_mode = #tpu.pipeline_mode<synchronous>, transform_indices = @transform_1, window_bounds = array<i64: 32, 16>}, {pipeline_mode = #tpu.pipeline_mode<synchronous>, transform_indices = @transform_2, window_bounds = array<i64: 1, 16>}, {transform_indices = @transform_3, window_bounds = array<i64: 8, 16>}]} {
    %c0 = arith.constant 0 : index
    %c0_0 = arith.constant 0 : index
    %0 = vector.load %arg1[%c0, %c0_0] : memref<8x32xf32, #tpu.memory_space<vmem>>, vector<8x32xf32>
    %c0_1 = arith.constant 0 : index
    %c0_2 = arith.constant 0 : index
    %1 = vector.load %arg2[%c0_1, %c0_2] : memref<32x16xf32, #tpu.memory_space<vmem>>, vector<32x16xf32>
    %cst = arith.constant dense<0.000000e+00> : vector<8x16xf32>
    %2 = tpu.matmul %0, %1, %cst {dimension_numbers = #tpu.dot_dimension_numbers<[1], [0], [0], [1], [0, 0, 1, 1], [], []>} : vector<8x32xf32>, vector<32x16xf32>, vector<8x16xf32> -> vector<8x16xf32>
    %3 = arith.mulf %2, %2 : vector<8x16xf32>
    %cst_3 = arith.constant dense<0.000000e+00> : vector<8xf32>
    %4 = vector.multi_reduction <add>, %3, %cst_3 [1] : vector<8x16xf32> to vector<8xf32>
    %5 = vector.shape_cast %4 : vector<8xf32> to vector<8x1xf32>
    %cst_4 = arith.constant 1.600000e+01 : f32
    %6 = vector.broadcast %cst_4 : f32 to vector<8x1xf32>
    %7 = arith.divf %5, %6 : vector<8x1xf32>
    %cst_5 = arith.constant 9.99999997E-7 : f32
    %8 = vector.broadcast %cst_5 : f32 to vector<8x1xf32>
    %9 = arith.addf %7, %8 : vector<8x1xf32>
    %10 = math.rsqrt %9 : vector<8x1xf32>
    %11 = vector.broadcast %10 : vector<8x1xf32> to vector<8x16xf32>
    %12 = arith.mulf %2, %11 : vector<8x16xf32>
    %c0_6 = arith.constant 0 : index
    %c0_7 = arith.constant 0 : index
    %13 = vector.load %arg3[%c0_6, %c0_7] : memref<1x16xf32, #tpu.memory_space<vmem>>, vector<1x16xf32>
    %14 = vector.broadcast %13 : vector<1x16xf32> to vector<8x16xf32>
    %15 = arith.mulf %12, %14 : vector<8x16xf32>
    %c0_8 = arith.constant 0 : index
    %c0_9 = arith.constant 0 : index
    %16 = vector.load %arg4[%c0_8, %c0_9] : memref<8x16xf32, #tpu.memory_space<vmem>>, vector<8x16xf32>
    tpu.vector_store %arg4[%c0_8, %c0_9], %15 {strides = array<i32>} : memref<8x16xf32, #tpu.memory_space<vmem>>, vector<8x16xf32>,
    return
  }
  func.func @transform_0(%arg0: i32) -> (i32, i32) {
    %c0_i32 = arith.constant 0 : i32
    %c0_i32_0 = arith.constant 0 : i32
    return %arg0, %c0_i32 : i32, i32
  }
  func.func @transform_1(%arg0: i32) -> (i32, i32) {
    %c0_i32 = arith.constant 0 : i32
    %c0_i32_0 = arith.constant 0 : i32
    %c0_i32_1 = arith.constant 0 : i32
    return %c0_i32, %c0_i32_0 : i32, i32
  }
  func.func @transform_2(%arg0: i32) -> (i32, i32) {
    %c0_i32 = arith.constant 0 : i32
    %c0_i32_0 = arith.constant 0 : i32
    %c0_i32_1 = arith.constant 0 : i32
    return %c0_i32, %c0_i32_0 : i32, i32
  }
  func.func @transform_3(%arg0: i32) -> (i32, i32) {
    %c0_i32 = arith.constant 0 : i32
    %c0_i32_0 = arith.constant 0 : i32
    return %arg0, %c0_i32 : i32, i32
  }
}

</mosaic_0001>

<llo_original>
// kernel: tpu_custom_call.1
$region0: #{tpu_custom_call.1}
  #allocation0 [shape = 'u32[]', space=smem, size = 0x4, offset = 0x4, fixed_abs, tag = 'smem constant byte address 0x4 - core index']
  #allocation1 [shape = 'u32[144,128]{1,0:T(1,128)}', space=vmem, size = 0x12000, scoped, tag = 'internal scratch']
  %s0 = inlined_call_operand.vmem [shape: f32[16,32], index: 0, kind: input, shape index: {}]
  %s1 = inlined_call_operand.vmem [shape: f32[32,16], index: 1, kind: input, shape index: {}]
  %s2 = inlined_call_operand.vmem [shape: f32[1,16], index: 2, kind: input, shape index: {}]
  %s3 = inlined_call_operand.hbm [shape: f32[16,16], index: 3, kind: output, shape index: {}]
  %s4 = sld [smem:[#allocation0]]
  $region45: #{tpu_custom_call.1} parent=0
    _
  %s6 = ssub.s32 1, %s4
  %s7 = scalar_select 0, %s6, %s4
  $region1: #{tpu_custom_call.1} parent=0
    #allocation2 [shape = 'u8[8192]{0}', space=vmem, size = 0x2000, scoped, tag = 'output window, operand 0']
    #allocation3 [shape = 's32[2]{0}', space=sflag, size = 0x8, scoped, tag = 'scoped memory for tpu_custom_call.1']
    %8 = vsyncpa [#allocation3], 0
    %s9 = scalar_lea.sflag [#allocation3], 1
    %10 = vsyncpa %s9, 0
    loop: start=0, step=1, limit=4
    $region2: #{tpu_custom_call.1} parent=1 // loop_pre_header
      _
    $region3: #{tpu_custom_call.1} parent=1 // loop_header
      %s12 = sphi 0, %s16
      %p13 = scmp.ge.s32.totalorder %s12, 4
      %s22 = sphi 0, %s24
      %s25 = sphi 0, %s22
      %s26 = sphi 0, %s25
      %s42 = sphi 0, %s26
      %s46 = sphi 0, %s46
      %s48 = sphi 0, %s46
      %s49 = sphi 0, %s48
      %s63 = sphi 0, %s49
      %s67 = sphi 0, %s67
      %s69 = sphi 0, %s67
      %s70 = sphi 0, %s69
      %s84 = sphi 0, %s70
      %s90 = sphi 0, %s92
      %s93 = sphi 0, %s90
      %s94 = sphi 0, %s93
      %s110 = sphi 0, %s94
    $region4: #{tpu_custom_call.1} parent=1 // loop_header_branch
      %15 = sbr.rel (%p13) target = $region8
    $region5: #{tpu_custom_call.1} parent=1 // loop_body
      %s17 = ssub.s32 %s12, 1
      %s18 = ssub.s32 %s12, 2
      %s19 = sadd.s32 %s12, 1
      %s20 = ssub.s32 %s12, %s19
      %p21 = scmp.eq.s32.totalorder %s20, 0
      %s23 = sadd.s32 %s22, 1
      %s24 = scalar_select %p21, %s22, %s23
      %p27 = pneg %p21
      %p28 = scmp.eq.s32.totalorder %s12, 1
      %p29 = por %p27, %p28
      %p30 = scmp.ne.s32.totalorder %s22, %s25
      %p31 = scmp.eq.s32.totalorder %s12, 0
      %p32 = por %p30, %p31
      %p33 = scmp.ne.s32.totalorder %s22, %s25
      %p34 = scmp.eq.s32.totalorder %s17, 1
      %p35 = por %p33, %p34
      %p36 = scmp.ne.s32.totalorder %s25, %s26
      %p37 = scmp.eq.s32.totalorder %s17, 0
      %p38 = por %p36, %p37
      %p39 = scmp.ne.s32.totalorder %s25, %s26
      %p40 = scmp.eq.s32.totalorder %s18, 1
      %p41 = por %p39, %p40
      %p43 = scmp.ne.s32.totalorder %s26, %s42
      %p44 = scmp.eq.s32.totalorder %s18, 0
      %p45 = por %p43, %p44
      %s47 = sadd.s32 %s46, 1
      %p50 = scmp.eq.s32.totalorder %s12, 1
      %p51 = scmp.ne.s32.totalorder %s46, %s48
      %p52 = scmp.eq.s32.totalorder %s12, 0
      %p53 = por %p51, %p52
      %p54 = scmp.ne.s32.totalorder %s46, %s48
      %p55 = scmp.eq.s32.totalorder %s17, 1
      %p56 = por %p54, %p55
      %p57 = scmp.ne.s32.totalorder %s48, %s49
      %p58 = scmp.eq.s32.totalorder %s17, 0
      %p59 = por %p57, %p58
      %p60 = scmp.ne.s32.totalorder %s48, %s49
      %p61 = scmp.eq.s32.totalorder %s18, 1
      %p62 = por %p60, %p61
      %p64 = scmp.ne.s32.totalorder %s49, %s63
      %p65 = scmp.eq.s32.totalorder %s18, 0
      %p66 = por %p64, %p65
      %s68 = sadd.s32 %s67, 1
      %p71 = scmp.eq.s32.totalorder %s12, 1
      %p72 = scmp.ne.s32.totalorder %s67, %s69
      %p73 = scmp.eq.s32.totalorder %s12, 0
      %p74 = por %p72, %p73
      %p75 = scmp.ne.s32.totalorder %s67, %s69
      %p76 = scmp.eq.s32.totalorder %s17, 1
      %p77 = por %p75, %p76
      %p78 = scmp.ne.s32.totalorder %s69, %s70
      %p79 = scmp.eq.s32.totalorder %s17, 0
      %p80 = por %p78, %p79
      %p81 = scmp.ne.s32.totalorder %s69, %s70
      %p82 = scmp.eq.s32.totalorder %s18, 1
      %p83 = por %p81, %p82
      %p85 = scmp.ne.s32.totalorder %s70, %s84
      %p86 = scmp.eq.s32.totalorder %s18, 0
      %p87 = por %p85, %p86
      %s88 = ssub.s32 %s12, %s19
      %p89 = scmp.eq.s32.totalorder %s88, 0
      %s91 = sadd.s32 %s90, 1
      %s92 = scalar_select %p89, %s90, %s91
      %p95 = pneg %p89
      %p96 = scmp.eq.s32.totalorder %s12, 1
      %p97 = por %p95, %p96
      %p98 = scmp.ne.s32.totalorder %s90, %s93
      %p99 = scmp.eq.s32.totalorder %s12, 0
      %p100 = por %p98, %p99
      %p101 = scmp.ne.s32.totalorder %s90, %s93
      %p102 = scmp.eq.s32.totalorder %s17, 1
      %p103 = por %p101, %p102
      %p104 = scmp.ne.s32.totalorder %s93, %s94
      %p105 = scmp.eq.s32.totalorder %s17, 0
      %p106 = por %p104, %p105
      %p107 = scmp.ne.s32.totalorder %s93, %s94
      %p108 = scmp.eq.s32.totalorder %s18, 1
      %p109 = por %p107, %p108
      %p111 = scmp.ne.s32.totalorder %s94, %s110
      %p112 = scmp.eq.s32.totalorder %s18, 0
      %p113 = por %p111, %p112
      %p114 = scmp.le.s32.totalorder 1, %s12
      %p115 = scmp.lt.s32.totalorder %s12, 3
      %p116 = pnand %p114, %p115
      %p117 = pneg %p116
      // Predicated region
      $region9: #{tpu_custom_call.1} parent=5 // pred_check
        _
      $region10: #{tpu_custom_call.1} parent=5 // pred_check_branch
        %119 = sbr.rel (%p116) target = $region12
      $region11: #{tpu_custom_call.1} parent=5 // pred_region
        %s120 = ssub.s32 %s12, 1
        // Predicated region
        $region13: #{tpu_custom_call.1} parent=11 // pred_check
          %p121 = pneg %p59
        $region14: #{tpu_custom_call.1} parent=11 // pred_check_branch
          %123 = sbr.rel (%p121) target = $region16
        $region15: #{tpu_custom_call.1} parent=11 // pred_region
          _
        $region16: #{tpu_custom_call.1} parent=11 // pred_fallthru
          _
        // Predicated region
        $region17: #{tpu_custom_call.1} parent=11 // pred_check
          %p124 = pneg %p80
        $region18: #{tpu_custom_call.1} parent=11 // pred_check_branch
          %126 = sbr.rel (%p124) target = $region20
        $region19: #{tpu_custom_call.1} parent=11 // pred_region
          _
        $region20: #{tpu_custom_call.1} parent=11 // pred_fallthru
          _
      $region12: #{tpu_custom_call.1} parent=5 // pred_fallthru
        _
      %p127 = scmp.lt.s32.totalorder %s12, 2
      // Predicated region
      $region21: #{tpu_custom_call.1} parent=5 // pred_check
        %p128 = pneg %p127
      $region22: #{tpu_custom_call.1} parent=5 // pred_check_branch
        %130 = sbr.rel (%p128) target = $region24
      $region23: #{tpu_custom_call.1} parent=5 // pred_region
        // Predicated region
        $region25: #{tpu_custom_call.1} parent=23 // pred_check
          %p131 = pneg %p32
        $region26: #{tpu_custom_call.1} parent=23 // pred_check_branch
          %133 = sbr.rel (%p131) target = $region28
        $region27: #{tpu_custom_call.1} parent=23 // pred_region
          %p134 = scmp.lt.s32.totalorder %s12, 1
          %s135 = scalar_select %p134, %s12, 1
          %s136 = smul.addr %s135, 8
          %s137 = scalar_lea.vmem %s0, %s136
        $region28: #{tpu_custom_call.1} parent=23 // pred_fallthru
          _
      $region24: #{tpu_custom_call.1} parent=5 // pred_fallthru
        _
      %p138 = scmp.le.s32.totalorder 1, %s12
      %p139 = scmp.lt.s32.totalorder %s12, 3
      %p140 = pnand %p138, %p139
      %p141 = pneg %p140
      // Predicated region
      $region29: #{tpu_custom_call.1} parent=5 // pred_check
        _
      $region30: #{tpu_custom_call.1} parent=5 // pred_check_branch
        %143 = sbr.rel (%p140) target = $region32
      $region31: #{tpu_custom_call.1} parent=5 // pred_region
        %s144 = ssub.s32 %s12, 1
        %p145 = scmp.lt.s32.totalorder %s17, 1
        %s146 = scalar_select %p145, %s17, 1
        %s147 = smul.addr %s146, 8
        %s148 = scalar_lea.vmem %s0, %s147
        %p149 = pneg %p38
        %p150 = pneg %p35
        %p151 = pneg %p59
        %p152 = pneg %p56
        %p153 = pneg %p80
        %p154 = pneg %p77
        %p155 = pneg %p106
        %p156 = pneg %p103
        %s157 = sand.u32 %s93, 1
        %s158 = scalar_lea.sflag [#allocation3], %s157
        %s159 = sand.u32 %s93, 1
        %s160 = smul.addr %s159, 8
        %s161 = scalar_lea.vmem [#allocation2], %s160
        %p162 = scmp.lt.s32.totalorder %s17, 1
        %s163 = scalar_select %p162, %s17, 1
        %s164 = smul.addr %s163, 8
        %s165 = scalar_lea.vmem %s0, %s164
        %v166 = vld [vmem:[%s165] sm:$0xff]
        %v167 = vld [vmem:[%s1] sm:$0xff]
        %v168 = vld [vmem:[%s1 + $0x8] sm:$0xff]
        %v169 = vld [vmem:[%s1 + $0x10] sm:$0xff]
        %v170 = vld [vmem:[%s1 + $0x18] sm:$0xff]
        %vm171 = vcmask 261120
        %v173 = vsel %vm171, %v166, 0
        %175 = vmatprep.subr.mxu0 0.0
        %176 = vmatpush1.msra.mxu0 %v167
        %177 = vmatprep.subr.mxu0 0.0
        %178 = vmatpush1.msra.mxu0 %v168
        %179 = vmatprep.subr.mxu0 0.0
        %180 = vmatpush1.msra.mxu0 %v169
        %181 = vmatprep.subr.mxu0 0.0
        %182 = vmatpush1.msra.mxu0 %v170
        %183 = vmatprep.subr.mxu0 0.0
        %184 = vmatpush1.msra.mxu0 0.0
        %185 = vmatprep.subr.mxu0 0.0
        %186 = vmatpush1.msra.mxu0 0.0
        %187 = vmatprep.subr.mxu0 0.0
        %188 = vmatpush1.msra.mxu0 0.0
        %189 = vmatprep.subr.mxu0 0.0
        %190 = vmatpush1.msra.mxu0 0.0
        %191 = vmatprep.subr.mxu0 0.0
        %192 = vmatpush1.msra.mxu0 0.0
        %193 = vmatprep.subr.mxu0 0.0
        %194 = vmatpush1.msra.mxu0 0.0
        %195 = vmatprep.subr.mxu0 0.0
        %196 = vmatpush1.msra.mxu0 0.0
        %197 = vmatprep.subr.mxu0 0.0
        %198 = vmatpush1.msra.mxu0 0.0
        %199 = vmatprep.subr.mxu0 0.0
        %200 = vmatpush1.msra.mxu0 0.0
        %201 = vmatprep.subr.mxu0 0.0
        %202 = vmatpush1.msra.mxu0 0.0
        %203 = vmatprep.subr.mxu0 0.0
        %204 = vmatpush1.msra.mxu0 0.0
        %205 = vmatprep.subr.mxu0 0.0
        %206 = vmatpush1.msra.mxu0 0.0
        %207 = vmatprep.subr.mxu0 0.0
        %208 = vmatpush1.msra.mxu0 0.0
        %209 = vmatprep.subr.mxu0 0.0
        %210 = vmatpush1.msra.mxu0 0.0
        %211 = vmatprep.subr.mxu0 0.0
        %212 = vmatpush1.msra.mxu0 0.0
        %213 = vmatprep.subr.mxu0 0.0
        %214 = vmatpush1.msra.mxu0 0.0
        %215 = vmatprep.subr.mxu0 0.0
        %216 = vmatpush1.msra.mxu0 0.0
        %217 = vmatprep.subr.mxu0 0.0
        %218 = vmatpush1.msra.mxu0 0.0
        %219 = vmatprep.subr.mxu0 0.0
        %220 = vmatpush1.msra.mxu0 0.0
        %221 = vmatprep.subr.mxu0 0.0
        %222 = vmatpush1.msra.mxu0 0.0
        %223 = vmatprep.subr.mxu0 0.0
        %224 = vmatpush1.msra.mxu0 0.0
        %225 = vmatprep.subr.mxu0 0.0
        %226 = vmatpush1.msra.mxu0 0.0
        %227 = vmatprep.subr.mxu0 0.0
        %228 = vmatpush1.msra.mxu0 0.0
        %229 = vmatprep.subr.mxu0 0.0
        %230 = vmatpush1.msra.mxu0 0.0
        %231 = vmatprep.subr.mxu0 0.0
        %232 = vmatpush1.msra.mxu0 0.0
        %233 = vmatprep.subr.mxu0 0.0
        %234 = vmatpush1.msra.mxu0 0.0
        %235 = vmatprep.subr.mxu0 0.0
        %236 = vmatpush1.msra.mxu0 0.0
        %237 = vmatprep.subr.mxu0 0.0
        %238 = vmatpush1.msra.mxu0 0.0
        %239 = vmatprep.mubr.f32.mxu0 0.0
        %240 = vmatmul.mubr.f32.gmra.mrb[0].mxu0 %v173
        %v241 = vpop.f32.mrb[0].mxu0
        %v242 = vadd.f32 0.0, %v241
        %v243 = vpop.f32.mrb[0].mxu0
        %244 = vdwg.mxu0
        %v245 = vmul.f32 %v242, %v242
        %vm246 = vcmask 130048
        %v247 = vsel %vm246, %v245, 0.0
        %248 = vadd.xlane.f32.xlu0 %v247
        %v249 = vpop.xlane.xlu0 %248
        %v250 = vrcp.pop 16.0
        %v251 = vmul.f32 %v249, %v250
        %v252 = vadd.f32 %v251, 1e-06
        %v253 = vrsqrt.pop %v252
        %v254 = vmul.f32 %v242, %v253
        %v255 = vld [vmem:[%s2] sm:$0x1]
        %v257 = vlaneseq
        %v258 = vshrl.u32 %v257, 7
        %v259 = vsub.s32 0, %v258
        %v260 = vrot.slane %v255, %v259
        %v262 = vmul.f32 %v254, %v260
        %263 = vst.msk [vmem:[%s161] sm:$0xff] %vm246, %v262
        %s264 = sand.u32 %s93, 1
        %s265 = scalar_lea.sflag [#allocation3], %s264
        %s266 = sand.u32 %s93, 1
        %s267 = smul.addr %s266, 8
        %s268 = scalar_lea.vmem [#allocation2], %s267
        // Predicated region
        $region33: #{tpu_custom_call.1} parent=31 // pred_check
          %p269 = pneg %p103
        $region34: #{tpu_custom_call.1} parent=31 // pred_check_branch
          %271 = sbr.rel (%p269) target = $region36
        $region35: #{tpu_custom_call.1} parent=31 // pred_region
          %s273 = ssub.s32 128, 128
          %274 = vsyncadd %s265, %s273
          %s275 = smul.addr %s17, 128
          %s276 = scalar_lea.hbm %s3, %s275
          %s278 = sshll.u32 %s268, 4
          %s279 = int_to_ptr.vmem [resolvable:$true] %s278
          %281 = dma.vmem_to_hbm [thread:$0]  %s279, 128, %s276, %s265
        $region36: #{tpu_custom_call.1} parent=31 // pred_fallthru
          _
      $region32: #{tpu_custom_call.1} parent=5 // pred_fallthru
        _
      %p282 = scmp.le.s32.totalorder 2, %s12
      // Predicated region
      $region37: #{tpu_custom_call.1} parent=5 // pred_check
        %p283 = pneg %p282
      $region38: #{tpu_custom_call.1} parent=5 // pred_check_branch
        %285 = sbr.rel (%p283) target = $region40
      $region39: #{tpu_custom_call.1} parent=5 // pred_region
        %s286 = ssub.s32 %s12, 2
        // Predicated region
        $region41: #{tpu_custom_call.1} parent=39 // pred_check
          %p287 = pneg %p109
        $region42: #{tpu_custom_call.1} parent=39 // pred_check_branch
          %289 = sbr.rel (%p287) target = $region44
        $region43: #{tpu_custom_call.1} parent=39 // pred_region
          %s290 = sand.u32 %s94, 1
          %s291 = scalar_lea.sflag [#allocation3], %s290
          %s292 = sand.u32 %s94, 1
          %s293 = smul.addr %s292, 8
          %s294 = scalar_lea.vmem [#allocation2], %s293
          %295 = dma.done %s291, 128
        $region44: #{tpu_custom_call.1} parent=39 // pred_fallthru
          _
      $region40: #{tpu_custom_call.1} parent=5 // pred_fallthru
        _
    $region6: #{tpu_custom_call.1} parent=1 // loop_footer
      %s16 = sadd.s32 1, %s12
    $region7: #{tpu_custom_call.1} parent=1 // loop_footer_branch
      %11 = sbr.rel target = $region3
    $region8: #{tpu_custom_call.1} parent=1 // loop_exit
      _
    %296 = vsyncpa [#allocation3], 1
    %s297 = scalar_lea.sflag [#allocation3], 1
    %298 = vsyncpa %s297, 1

</llo_original>
